<compile_context>
chip_gen: v5e
topology: v5e:2x2
jax: 0.10.0
libtpu: 0.0.40
codegen_flags: <defaults>
</compile_context>

<pallas_src>
import functools

import jax
import jax.numpy as jnp
from jax.experimental import pallas as pl
from jax.experimental.pallas import tpu as pltpu


def _cdiv(a, b):
    return -(-a // b)


def _round_up(x, m):
    return _cdiv(x, m) * m


# Sweepable 4096-16384; 8192 keeps double-buffered in/out blocks plus spilled
# [64, tile_n] intermediates well inside every generation's scoped-VMEM budget
# while amortizing the ~0.35 us per-grid-step overhead.
_MAX_TILE_N = 8192


def _choose_node_tiling(n, tile_n):
    n = max(n, 1)
    if tile_n is not None:
        tile_n = max(128, _round_up(tile_n, 128))
        return tile_n, _round_up(n, tile_n)
    # Even number (>=2) of grid steps so v7x's two TensorCores both get work
    # (the node axis is marked "parallel"); tiles are 128-lane multiples so
    # every output store is lane-dense, capped at _MAX_TILE_N.
    num_steps = 2 * max(1, _cdiv(n, 2 * _MAX_TILE_N))
    tile_n = _round_up(_cdiv(n, num_steps), 128)
    return tile_n, num_steps * tile_n


def _mlp_kernel(x_ref, w1_ref, b1_ref, w2_ref, b2_ref, w3_ref, b3_ref, out_ref,
                *, include_original_features, d_lat):
    """Feature-major MLP tile: Hᵀ = W3ᵀ·relu(W2ᵀ·relu(W1ᵀ·xᵀ + b1) + b2) + b3.

    Nodes live on the 128-wide lane axis, features on sublanes, so every load
    and store is lane-dense (no masked partial stores). Matmuls run in f32 with
    f32 accumulation; bias add / ReLU stay f32 on the VPU.
    """
    x = x_ref[...]                                   # [d_in, tile_n], input dtype
    x32 = x.astype(jnp.float32)
    h = jnp.dot(w1_ref[...], x32, preferred_element_type=jnp.float32) + b1_ref[...]
    h = jnp.maximum(h, 0.0)
    h = jnp.dot(w2_ref[...], h, preferred_element_type=jnp.float32) + b2_ref[...]
    h = jnp.maximum(h, 0.0)
    h = jnp.dot(w3_ref[...], h, preferred_element_type=jnp.float32) + b3_ref[...]
    if include_original_features:
        # Fused epilogue: two direct slice stores (no concatenate temp). x is
        # read from HBM once and the (H, x) output block is written exactly once.
        out_ref[:d_lat, :] = h.astype(out_ref.dtype)
        out_ref[d_lat:, :] = x.astype(out_ref.dtype)
    else:
        out_ref[...] = h.astype(out_ref.dtype)


def _forward_feature_major(x_t, params, *, original_features, tile_n):
    """Core path: x_t is [d_in, N] (nodes on lanes); returns [d_out, N]."""
    w1, b1, w2, b2, w3, b3 = params
    d_in, n = x_t.shape
    d_h1, d_h2, d_lat = w1.shape[1], w2.shape[1], w3.shape[1]
    d_out = d_lat + d_in if original_features else d_lat

    f32 = jnp.float32
    # Frozen weights stay f32 (tiny, grid-resident); transposed once for the
    # feature-major matmuls. Biases become lane-broadcast columns.
    w1t, w2t, w3t = (jnp.asarray(w, f32).T for w in (w1, w2, w3))
    b1c, b2c, b3c = (jnp.asarray(b, f32).reshape(-1, 1) for b in (b1, b2, b3))

    tile_n, n_pad = _choose_node_tiling(n, tile_n)
    x_in = x_t
    if n_pad != n:
        x_in = jnp.pad(x_in, ((0, 0), (0, n_pad - n)))

    grid = (n_pad // tile_n,)
    resident = lambda i: (0, 0)  # weights/biases: one block, resident across grid

    kernel = functools.partial(
        _mlp_kernel, include_original_features=original_features, d_lat=d_lat)

    out = pl.pallas_call(
        kernel,
        out_shape=jax.ShapeDtypeStruct((d_out, n_pad), x_t.dtype),
        grid_spec=pltpu.PrefetchScalarGridSpec(
            num_scalar_prefetch=0,
            grid=grid,
            in_specs=[
                pl.BlockSpec((d_in, tile_n), lambda i: (0, i)),
                pl.BlockSpec((d_h1, d_in), resident),
                pl.BlockSpec((d_h1, 1), resident),
                pl.BlockSpec((d_h2, d_h1), resident),
                pl.BlockSpec((d_h2, 1), resident),
                pl.BlockSpec((d_lat, d_h2), resident),
                pl.BlockSpec((d_lat, 1), resident),
            ],
            out_specs=pl.BlockSpec((d_out, tile_n), lambda i: (0, i)),
        ),
        compiler_params=pltpu.CompilerParams(
            dimension_semantics=("parallel",),
            # Plenty for 8192-node tiles in the sublane-packed layout; stays at
            # or below the scoped default on all of v5e/v6e/v7x.
            vmem_limit_bytes=32 * 1024 * 1024,
        ),
    )(x_in, w1t, b1c, w2t, b2c, w3t, b3c)

    if n_pad != n:
        out = out[:, :n]
    return out


def mlpc_transformer_forward(x, params, *, original_features=False,
                             feature_major_io=False, tile_n=None):
    """MLPCTransformer.forward semantics on the node-feature tensor.

    H = ml(data)["H"]; data.x = cat((H, x), dim=1) if original_features else H.

    feature_major_io=False (default): x is [N, d_in] and the result is
        [N, d_out], exactly like the PyTorch module; the wrapper transposes to
        the kernel's lane-dense feature-major layout at the boundary.
    feature_major_io=True: x is [d_in, N] and the result is [d_out, N] — the
        zero-transpose performance path when the surrounding pipeline adopts
        the feature-major point-cloud layout.
    """
    if feature_major_io:
        return _forward_feature_major(
            x, params, original_features=original_features, tile_n=tile_n)
    out_t = _forward_feature_major(
        x.T, params, original_features=original_features, tile_n=tile_n)
    return out_t.T


def init_params(key, d_in, d_h1, d_h2, d_lat, dtype=jnp.float32):
    """Deterministic synthetic init of the (frozen) ML model parameters."""
    ks = jax.random.split(key, 6)
    scale = lambda fan_in: 1.0 / jnp.sqrt(jnp.float32(fan_in))
    w1 = jax.random.normal(ks[0], (d_in, d_h1), dtype) * scale(d_in)
    b1 = jax.random.normal(ks[1], (d_h1,), dtype) * 0.01
    w2 = jax.random.normal(ks[2], (d_h1, d_h2), dtype) * scale(d_h1)
    b2 = jax.random.normal(ks[3], (d_h2,), dtype) * 0.01
    w3 = jax.random.normal(ks[4], (d_h2, d_lat), dtype) * scale(d_h2)
    b3 = jax.random.normal(ks[5], (d_lat,), dtype) * 0.01
    return (w1, b1, w2, b2, w3, b3)


def _reference(x, params, *, original_features=False):
    """Pure-JAX f32 reference (exact module semantics)."""
    w1, b1, w2, b2, w3, b3 = params
    h = jnp.maximum(x @ w1 + b1, 0.0)
    h = jnp.maximum(h @ w2 + b2, 0.0)
    h = h @ w3 + b3
    return jnp.concatenate((h, x), axis=1) if original_features else h


if __name__ == "__main__":
    key = jax.random.PRNGKey(0)
    k_x, k_p = jax.random.split(key)

    # Small point cloud: 256 nodes, 14 input features (typical trackML node
    # dim), hidden widths 64/64, latent dim 8.
    N, D_IN, D_H1, D_H2, D_LAT = 256, 14, 64, 64, 8
    x = jax.random.normal(k_x, (N, D_IN), jnp.float32)
    params = init_params(k_p, D_IN, D_H1, D_H2, D_LAT)

    ref_cat = _reference(x, params, original_features=True)
    ref_h = _reference(x, params, original_features=False)

    # Node-major (module-faithful) path, original_features=True.
    fwd = jax.jit(functools.partial(mlpc_transformer_forward,
                                    original_features=True))
    out = jax.block_until_ready(fwd(x, params))
    assert out.shape == (N, D_LAT + D_IN), out.shape
    assert jnp.allclose(out, ref_cat, atol=2e-2, rtol=2e-2), \
        float(jnp.max(jnp.abs(out - ref_cat)))
    # Original features pass through exactly (all-f32 path, no bf16 casts).
    assert bool(jnp.array_equal(out[:, D_LAT:], x))

    # original_features=False branch (data.x = H).
    out_h = jax.block_until_ready(jax.jit(mlpc_transformer_forward)(x, params))
    assert out_h.shape == (N, D_LAT), out_h.shape
    assert jnp.allclose(out_h, ref_h, atol=2e-2, rtol=2e-2)

    # Feature-major (lane-dense, zero-transpose) performance path.
    fwd_fm = jax.jit(functools.partial(mlpc_transformer_forward,
                                       original_features=True,
                                       feature_major_io=True))
    out_fm = jax.block_until_ready(fwd_fm(x.T, params))
    assert out_fm.shape == (D_LAT + D_IN, N), out_fm.shape
    assert jnp.allclose(out_fm.T, ref_cat, atol=2e-2, rtol=2e-2)

    # Non-aligned N plus explicit small tiles: exercises node padding and a
    # multi-step grid.
    N2 = 300
    x2 = jax.random.normal(k_x, (N2, D_IN), jnp.float32)
    fwd2 = jax.jit(functools.partial(mlpc_transformer_forward,
                                     original_features=True, tile_n=128))
    out2 = jax.block_until_ready(fwd2(x2, params))
    assert out2.shape == (N2, D_LAT + D_IN), out2.shape
    assert jnp.allclose(out2, _reference(x2, params, original_features=True),
                        atol=2e-2, rtol=2e-2)

    print("KERNEL_OK")
</pallas_src>

<mosaic_0001>
module attributes {stable_mosaic.version = 11 : i64} {
  func.func @_mlp_kernel(%arg0: i32, %arg1: memref<14x128xf32, #tpu.memory_space<vmem>>, %arg2: memref<64x14xf32, #tpu.memory_space<vmem>>, %arg3: memref<64x1xf32, #tpu.memory_space<vmem>>, %arg4: memref<64x64xf32, #tpu.memory_space<vmem>>, %arg5: memref<64x1xf32, #tpu.memory_space<vmem>>, %arg6: memref<8x64xf32, #tpu.memory_space<vmem>>, %arg7: memref<8x1xf32, #tpu.memory_space<vmem>>, %arg8: memref<22x128xf32, #tpu.memory_space<vmem>>) attributes {dimension_semantics = [#tpu.dimension_semantics<parallel>], iteration_bounds = array<i64: 2>, scalar_prefetch = 0 : i64, scratch_operands = 0 : i64, tpu.core_type = #tpu.core_type<tc>, window_params = [{transform_indices = @transform_0, window_bounds = array<i64: 14, 128>}, {pipeline_mode = #tpu.pipeline_mode<synchronous>, transform_indices = @transform_1, window_bounds = array<i64: 64, 14>}, {pipeline_mode = #tpu.pipeline_mode<synchronous>, transform_indices = @transform_2, window_bounds = array<i64: 64, 1>}, {pipeline_mode = #tpu.pipeline_mode<synchronous>, transform_indices = @transform_3, window_bounds = array<i64: 64, 64>}, {pipeline_mode = #tpu.pipeline_mode<synchronous>, transform_indices = @transform_4, window_bounds = array<i64: 64, 1>}, {pipeline_mode = #tpu.pipeline_mode<synchronous>, transform_indices = @transform_5, window_bounds = array<i64: 8, 64>}, {pipeline_mode = #tpu.pipeline_mode<synchronous>, transform_indices = @transform_6, window_bounds = array<i64: 8, 1>}, {transform_indices = @transform_7, window_bounds = array<i64: 22, 128>}]} {
    %c0 = arith.constant 0 : index
    %c0_0 = arith.constant 0 : index
    %0 = vector.load %arg1[%c0, %c0_0] : memref<14x128xf32, #tpu.memory_space<vmem>>, vector<14x128xf32>
    %c0_1 = arith.constant 0 : index
    %c0_2 = arith.constant 0 : index
    %1 = vector.load %arg2[%c0_1, %c0_2] : memref<64x14xf32, #tpu.memory_space<vmem>>, vector<64x14xf32>
    %cst = arith.constant dense<0.000000e+00> : vector<64x128xf32>
    %2 = tpu.matmul %1, %0, %cst {dimension_numbers = #tpu.dot_dimension_numbers<[1], [0], [0], [1], [0, 0, 1, 1], [], []>} : vector<64x14xf32>, vector<14x128xf32>, vector<64x128xf32> -> vector<64x128xf32>
    %c0_3 = arith.constant 0 : index
    %c0_4 = arith.constant 0 : index
    %3 = vector.load %arg3[%c0_3, %c0_4] : memref<64x1xf32, #tpu.memory_space<vmem>>, vector<64x1xf32>
    %4 = vector.broadcast %3 : vector<64x1xf32> to vector<64x128xf32>
    %5 = arith.addf %2, %4 : vector<64x128xf32>
    %cst_5 = arith.constant 0.000000e+00 : f32
    %6 = vector.broadcast %cst_5 : f32 to vector<64x128xf32>
    %7 = arith.maximumf %5, %6 : vector<64x128xf32>
    %c0_6 = arith.constant 0 : index
    %c0_7 = arith.constant 0 : index
    %8 = vector.load %arg4[%c0_6, %c0_7] : memref<64x64xf32, #tpu.memory_space<vmem>>, vector<64x64xf32>
    %cst_8 = arith.constant dense<0.000000e+00> : vector<64x128xf32>
    %9 = tpu.matmul %8, %7, %cst_8 {dimension_numbers = #tpu.dot_dimension_numbers<[1], [0], [0], [1], [0, 0, 1, 1], [], []>} : vector<64x64xf32>, vector<64x128xf32>, vector<64x128xf32> -> vector<64x128xf32>
    %c0_9 = arith.constant 0 : index
    %c0_10 = arith.constant 0 : index
    %10 = vector.load %arg5[%c0_9, %c0_10] : memref<64x1xf32, #tpu.memory_space<vmem>>, vector<64x1xf32>
    %11 = vector.broadcast %10 : vector<64x1xf32> to vector<64x128xf32>
    %12 = arith.addf %9, %11 : vector<64x128xf32>
    %cst_11 = arith.constant 0.000000e+00 : f32
    %13 = vector.broadcast %cst_11 : f32 to vector<64x128xf32>
    %14 = arith.maximumf %12, %13 : vector<64x128xf32>
    %c0_12 = arith.constant 0 : index
    %c0_13 = arith.constant 0 : index
    %15 = vector.load %arg6[%c0_12, %c0_13] : memref<8x64xf32, #tpu.memory_space<vmem>>, vector<8x64xf32>
    %cst_14 = arith.constant dense<0.000000e+00> : vector<8x128xf32>
    %16 = tpu.matmul %15, %14, %cst_14 {dimension_numbers = #tpu.dot_dimension_numbers<[1], [0], [0], [1], [0, 0, 1, 1], [], []>} : vector<8x64xf32>, vector<64x128xf32>, vector<8x128xf32> -> vector<8x128xf32>
    %c0_15 = arith.constant 0 : index
    %c0_16 = arith.constant 0 : index
    %17 = vector.load %arg7[%c0_15, %c0_16] : memref<8x1xf32, #tpu.memory_space<vmem>>, vector<8x1xf32>
    %18 = vector.broadcast %17 : vector<8x1xf32> to vector<8x128xf32>
    %19 = arith.addf %16, %18 : vector<8x128xf32>
    %c0_17 = arith.constant 0 : index
    %c0_18 = arith.constant 0 : index
    %20 = vector.load %arg8[%c0_17, %c0_18] : memref<22x128xf32, #tpu.memory_space<vmem>>, vector<8x128xf32>
    tpu.vector_store %arg8[%c0_17, %c0_18], %19 {strides = array<i32>} : memref<22x128xf32, #tpu.memory_space<vmem>>, vector<8x128xf32>,
    %c8 = arith.constant 8 : index
    %c0_19 = arith.constant 0 : index
    %21 = vector.load %arg8[%c8, %c0_19] : memref<22x128xf32, #tpu.memory_space<vmem>>, vector<14x128xf32>
    tpu.vector_store %arg8[%c8, %c0_19], %0 {strides = array<i32>} : memref<22x128xf32, #tpu.memory_space<vmem>>, vector<14x128xf32>,
    return
  }
  func.func @transform_0(%arg0: i32) -> (i32, i32) {
    %c0_i32 = arith.constant 0 : i32
    %c0_i32_0 = arith.constant 0 : i32
    return %c0_i32, %arg0 : i32, i32
  }
  func.func @transform_1(%arg0: i32) -> (i32, i32) {
    %c0_i32 = arith.constant 0 : i32
    %c0_i32_0 = arith.constant 0 : i32
    %c0_i32_1 = arith.constant 0 : i32
    return %c0_i32, %c0_i32_0 : i32, i32
  }
  func.func @transform_2(%arg0: i32) -> (i32, i32) {
    %c0_i32 = arith.constant 0 : i32
    %c0_i32_0 = arith.constant 0 : i32
    %c0_i32_1 = arith.constant 0 : i32
    return %c0_i32, %c0_i32_0 : i32, i32
  }
  func.func @transform_3(%arg0: i32) -> (i32, i32) {
    %c0_i32 = arith.constant 0 : i32
    %c0_i32_0 = arith.constant 0 : i32
    %c0_i32_1 = arith.constant 0 : i32
    return %c0_i32, %c0_i32_0 : i32, i32
  }
  func.func @transform_4(%arg0: i32) -> (i32, i32) {
    %c0_i32 = arith.constant 0 : i32
    %c0_i32_0 = arith.constant 0 : i32
    %c0_i32_1 = arith.constant 0 : i32
    return %c0_i32, %c0_i32_0 : i32, i32
  }
  func.func @transform_5(%arg0: i32) -> (i32, i32) {
    %c0_i32 = arith.constant 0 : i32
    %c0_i32_0 = arith.constant 0 : i32
    %c0_i32_1 = arith.constant 0 : i32
    return %c0_i32, %c0_i32_0 : i32, i32
  }
  func.func @transform_6(%arg0: i32) -> (i32, i32) {
    %c0_i32 = arith.constant 0 : i32
    %c0_i32_0 = arith.constant 0 : i32
    %c0_i32_1 = arith.constant 0 : i32
    return %c0_i32, %c0_i32_0 : i32, i32
  }
  func.func @transform_7(%arg0: i32) -> (i32, i32) {
    %c0_i32 = arith.constant 0 : i32
    %c0_i32_0 = arith.constant 0 : i32
    return %c0_i32, %arg0 : i32, i32
  }
}

</mosaic_0001>

<llo_original>
// kernel: mlpc_transformer_forward.1
$region0: #{mlpc_transformer_forward.1}
  #allocation0 [shape = 'u32[]', space=smem, size = 0x4, offset = 0x4, fixed_abs, tag = 'smem constant byte address 0x4 - core index']
  #allocation1 [shape = 'u32[72,128]{1,0:T(1,128)}', space=vmem, size = 0x9000, scoped, tag = 'internal scratch']
  %s0 = inlined_call_operand.vmem [shape: f32[14,256], index: 0, kind: input, shape index: {}]
  %s1 = inlined_call_operand.vmem [shape: f32[64,14], index: 1, kind: input, shape index: {}]
  %s2 = inlined_call_operand.vmem [shape: f32[64,1], index: 2, kind: input, shape index: {}]
  %s3 = inlined_call_operand.vmem [shape: f32[64,64], index: 3, kind: input, shape index: {}]
  %s4 = inlined_call_operand.vmem [shape: f32[64,1], index: 4, kind: input, shape index: {}]
  %s5 = inlined_call_operand.vmem [shape: f32[8,64], index: 5, kind: input, shape index: {}]
  %s6 = inlined_call_operand.vmem [shape: f32[8,1], index: 6, kind: input, shape index: {}]
  %s7 = inlined_call_operand.hbm [shape: f32[22,256], index: 7, kind: output, shape index: {}]
  %s8 = sld [smem:[#allocation0]]
  $region99: #{mlpc_transformer_forward.1} parent=0
    _
  %s10 = ssub.s32 1, %s8
  %s11 = scalar_select 0, %s10, %s8
  $region1: #{mlpc_transformer_forward.1} parent=0
    #allocation2 [shape = 'u8[16384]{0}', space=vmem, size = 0x4000, scoped, tag = 'input window, operand 0']
    #allocation3 [shape = 'u8[24576]{0}', space=vmem, size = 0x6000, scoped, tag = 'output window, operand 0']
    #allocation4 [shape = 's32[2]{0}', space=sflag, size = 0x8, scoped, tag = 'scoped memory for mlpc_transformer_forward.1']
    %12 = vsyncpa [#allocation4], 0
    %s13 = scalar_lea.sflag [#allocation4], 1
    %14 = vsyncpa %s13, 0
    loop: start=0, step=1, limit=4
    $region2: #{mlpc_transformer_forward.1} parent=1 // loop_pre_header
      _
    $region3: #{mlpc_transformer_forward.1} parent=1 // loop_header
      %s16 = sphi 0, %s20
      %p17 = scmp.ge.s32.totalorder %s16, 4
      %s26 = sphi 0, %s28
      %s29 = sphi 0, %s26
      %s30 = sphi 0, %s29
      %s46 = sphi 0, %s30
      %s50 = sphi 0, %s50
      %s52 = sphi 0, %s50
      %s53 = sphi 0, %s52
      %s67 = sphi 0, %s53
      %s71 = sphi 0, %s71
      %s73 = sphi 0, %s71
      %s74 = sphi 0, %s73
      %s88 = sphi 0, %s74
      %s92 = sphi 0, %s92
      %s94 = sphi 0, %s92
      %s95 = sphi 0, %s94
      %s109 = sphi 0, %s95
      %s113 = sphi 0, %s113
      %s115 = sphi 0, %s113
      %s116 = sphi 0, %s115
      %s130 = sphi 0, %s116
      %s134 = sphi 0, %s134
      %s136 = sphi 0, %s134
      %s137 = sphi 0, %s136
      %s151 = sphi 0, %s137
      %s155 = sphi 0, %s155
      %s157 = sphi 0, %s155
      %s158 = sphi 0, %s157
      %s172 = sphi 0, %s158
      %s178 = sphi 0, %s180
      %s181 = sphi 0, %s178
      %s182 = sphi 0, %s181
      %s198 = sphi 0, %s182
    $region4: #{mlpc_transformer_forward.1} parent=1 // loop_header_branch
      %19 = sbr.rel (%p17) target = $region8
    $region5: #{mlpc_transformer_forward.1} parent=1 // loop_body
      %s21 = ssub.s32 %s16, 1
      %s22 = ssub.s32 %s16, 2
      %s23 = sadd.s32 %s16, 1
      %s24 = ssub.s32 %s16, %s23
      %p25 = scmp.eq.s32.totalorder %s24, 0
      %s27 = sadd.s32 %s26, 1
      %s28 = scalar_select %p25, %s26, %s27
      %p31 = pneg %p25
      %p32 = scmp.eq.s32.totalorder %s16, 1
      %p33 = por %p31, %p32
      %p34 = scmp.ne.s32.totalorder %s26, %s29
      %p35 = scmp.eq.s32.totalorder %s16, 0
      %p36 = por %p34, %p35
      %p37 = scmp.ne.s32.totalorder %s26, %s29
      %p38 = scmp.eq.s32.totalorder %s21, 1
      %p39 = por %p37, %p38
      %p40 = scmp.ne.s32.totalorder %s29, %s30
      %p41 = scmp.eq.s32.totalorder %s21, 0
      %p42 = por %p40, %p41
      %p43 = scmp.ne.s32.totalorder %s29, %s30
      %p44 = scmp.eq.s32.totalorder %s22, 1
      %p45 = por %p43, %p44
      %p47 = scmp.ne.s32.totalorder %s30, %s46
      %p48 = scmp.eq.s32.totalorder %s22, 0
      %p49 = por %p47, %p48
      %s51 = sadd.s32 %s50, 1
      %p54 = scmp.eq.s32.totalorder %s16, 1
      %p55 = scmp.ne.s32.totalorder %s50, %s52
      %p56 = scmp.eq.s32.totalorder %s16, 0
      %p57 = por %p55, %p56
      %p58 = scmp.ne.s32.totalorder %s50, %s52
      %p59 = scmp.eq.s32.totalorder %s21, 1
      %p60 = por %p58, %p59
      %p61 = scmp.ne.s32.totalorder %s52, %s53
      %p62 = scmp.eq.s32.totalorder %s21, 0
      %p63 = por %p61, %p62
      %p64 = scmp.ne.s32.totalorder %s52, %s53
      %p65 = scmp.eq.s32.totalorder %s22, 1
      %p66 = por %p64, %p65
      %p68 = scmp.ne.s32.totalorder %s53, %s67
      %p69 = scmp.eq.s32.totalorder %s22, 0
      %p70 = por %p68, %p69
      %s72 = sadd.s32 %s71, 1
      %p75 = scmp.eq.s32.totalorder %s16, 1
      %p76 = scmp.ne.s32.totalorder %s71, %s73
      %p77 = scmp.eq.s32.totalorder %s16, 0
      %p78 = por %p76, %p77
      %p79 = scmp.ne.s32.totalorder %s71, %s73
      %p80 = scmp.eq.s32.totalorder %s21, 1
      %p81 = por %p79, %p80
      %p82 = scmp.ne.s32.totalorder %s73, %s74
      %p83 = scmp.eq.s32.totalorder %s21, 0
      %p84 = por %p82, %p83
      %p85 = scmp.ne.s32.totalorder %s73, %s74
      %p86 = scmp.eq.s32.totalorder %s22, 1
      %p87 = por %p85, %p86
      %p89 = scmp.ne.s32.totalorder %s74, %s88
      %p90 = scmp.eq.s32.totalorder %s22, 0
      %p91 = por %p89, %p90
      %s93 = sadd.s32 %s92, 1
      %p96 = scmp.eq.s32.totalorder %s16, 1
      %p97 = scmp.ne.s32.totalorder %s92, %s94
      %p98 = scmp.eq.s32.totalorder %s16, 0
      %p99 = por %p97, %p98
      %p100 = scmp.ne.s32.totalorder %s92, %s94
      %p101 = scmp.eq.s32.totalorder %s21, 1
      %p102 = por %p100, %p101
      %p103 = scmp.ne.s32.totalorder %s94, %s95
      %p104 = scmp.eq.s32.totalorder %s21, 0
      %p105 = por %p103, %p104
      %p106 = scmp.ne.s32.totalorder %s94, %s95
      %p107 = scmp.eq.s32.totalorder %s22, 1
      %p108 = por %p106, %p107
      %p110 = scmp.ne.s32.totalorder %s95, %s109
      %p111 = scmp.eq.s32.totalorder %s22, 0
      %p112 = por %p110, %p111
      %s114 = sadd.s32 %s113, 1
      %p117 = scmp.eq.s32.totalorder %s16, 1
      %p118 = scmp.ne.s32.totalorder %s113, %s115
      %p119 = scmp.eq.s32.totalorder %s16, 0
      %p120 = por %p118, %p119
      %p121 = scmp.ne.s32.totalorder %s113, %s115
      %p122 = scmp.eq.s32.totalorder %s21, 1
      %p123 = por %p121, %p122
      %p124 = scmp.ne.s32.totalorder %s115, %s116
      %p125 = scmp.eq.s32.totalorder %s21, 0
      %p126 = por %p124, %p125
      %p127 = scmp.ne.s32.totalorder %s115, %s116
      %p128 = scmp.eq.s32.totalorder %s22, 1
      %p129 = por %p127, %p128
      %p131 = scmp.ne.s32.totalorder %s116, %s130
      %p132 = scmp.eq.s32.totalorder %s22, 0
      %p133 = por %p131, %p132
      %s135 = sadd.s32 %s134, 1
      %p138 = scmp.eq.s32.totalorder %s16, 1
      %p139 = scmp.ne.s32.totalorder %s134, %s136
      %p140 = scmp.eq.s32.totalorder %s16, 0
      %p141 = por %p139, %p140
      %p142 = scmp.ne.s32.totalorder %s134, %s136
      %p143 = scmp.eq.s32.totalorder %s21, 1
      %p144 = por %p142, %p143
      %p145 = scmp.ne.s32.totalorder %s136, %s137
      %p146 = scmp.eq.s32.totalorder %s21, 0
      %p147 = por %p145, %p146
      %p148 = scmp.ne.s32.totalorder %s136, %s137
      %p149 = scmp.eq.s32.totalorder %s22, 1
      %p150 = por %p148, %p149
      %p152 = scmp.ne.s32.totalorder %s137, %s151
      %p153 = scmp.eq.s32.totalorder %s22, 0
      %p154 = por %p152, %p153
      %s156 = sadd.s32 %s155, 1
      %p159 = scmp.eq.s32.totalorder %s16, 1
      %p160 = scmp.ne.s32.totalorder %s155, %s157
      %p161 = scmp.eq.s32.totalorder %s16, 0
      %p162 = por %p160, %p161
      %p163 = scmp.ne.s32.totalorder %s155, %s157
      %p164 = scmp.eq.s32.totalorder %s21, 1
      %p165 = por %p163, %p164
      %p166 = scmp.ne.s32.totalorder %s157, %s158
      %p167 = scmp.eq.s32.totalorder %s21, 0
      %p168 = por %p166, %p167
      %p169 = scmp.ne.s32.totalorder %s157, %s158
      %p170 = scmp.eq.s32.totalorder %s22, 1
      %p171 = por %p169, %p170
      %p173 = scmp.ne.s32.totalorder %s158, %s172
      %p174 = scmp.eq.s32.totalorder %s22, 0
      %p175 = por %p173, %p174
      %s176 = ssub.s32 %s16, %s23
      %p177 = scmp.eq.s32.totalorder %s176, 0
      %s179 = sadd.s32 %s178, 1
      %s180 = scalar_select %p177, %s178, %s179
      %p183 = pneg %p177
      %p184 = scmp.eq.s32.totalorder %s16, 1
      %p185 = por %p183, %p184
      %p186 = scmp.ne.s32.totalorder %s178, %s181
      %p187 = scmp.eq.s32.totalorder %s16, 0
      %p188 = por %p186, %p187
      %p189 = scmp.ne.s32.totalorder %s178, %s181
      %p190 = scmp.eq.s32.totalorder %s21, 1
      %p191 = por %p189, %p190
      %p192 = scmp.ne.s32.totalorder %s181, %s182
      %p193 = scmp.eq.s32.totalorder %s21, 0
      %p194 = por %p192, %p193
      %p195 = scmp.ne.s32.totalorder %s181, %s182
      %p196 = scmp.eq.s32.totalorder %s22, 1
      %p197 = por %p195, %p196
      %p199 = scmp.ne.s32.totalorder %s182, %s198
      %p200 = scmp.eq.s32.totalorder %s22, 0
      %p201 = por %p199, %p200
      %p202 = scmp.le.s32.totalorder 1, %s16
      %p203 = scmp.lt.s32.totalorder %s16, 3
      %p204 = pnand %p202, %p203
      %p205 = pneg %p204
      // Predicated region
      $region9: #{mlpc_transformer_forward.1} parent=5 // pred_check
        _
      $region10: #{mlpc_transformer_forward.1} parent=5 // pred_check_branch
        %207 = sbr.rel (%p204) target = $region12
      $region11: #{mlpc_transformer_forward.1} parent=5 // pred_region
        %s208 = ssub.s32 %s16, 1
        // Predicated region
        $region13: #{mlpc_transformer_forward.1} parent=11 // pred_check
          %p209 = pneg %p63
        $region14: #{mlpc_transformer_forward.1} parent=11 // pred_check_branch
          %211 = sbr.rel (%p209) target = $region16
        $region15: #{mlpc_transformer_forward.1} parent=11 // pred_region
          _
        $region16: #{mlpc_transformer_forward.1} parent=11 // pred_fallthru
          _
        // Predicated region
        $region17: #{mlpc_transformer_forward.1} parent=11 // pred_check
          %p212 = pneg %p84
        $region18: #{mlpc_transformer_forward.1} parent=11 // pred_check_branch
          %214 = sbr.rel (%p212) target = $region20
        $region19: #{mlpc_transformer_forward.1} parent=11 // pred_region
          _
        $region20: #{mlpc_transformer_forward.1} parent=11 // pred_fallthru
          _
        // Predicated region
        $region21: #{mlpc_transformer_forward.1} parent=11 // pred_check
          %p215 = pneg %p105
        $region22: #{mlpc_transformer_forward.1} parent=11 // pred_check_branch
          %217 = sbr.rel (%p215) target = $region24
        $region23: #{mlpc_transformer_forward.1} parent=11 // pred_region
          _
        $region24: #{mlpc_transformer_forward.1} parent=11 // pred_fallthru
          _
        // Predicated region
        $region25: #{mlpc_transformer_forward.1} parent=11 // pred_check
          %p218 = pneg %p126
        $region26: #{mlpc_transformer_forward.1} parent=11 // pred_check_branch
          %220 = sbr.rel (%p218) target = $region28
        $region27: #{mlpc_transformer_forward.1} parent=11 // pred_region
          _
        $region28: #{mlpc_transformer_forward.1} parent=11 // pred_fallthru
          _
        // Predicated region
        $region29: #{mlpc_transformer_forward.1} parent=11 // pred_check
          %p221 = pneg %p147
        $region30: #{mlpc_transformer_forward.1} parent=11 // pred_check_branch
          %223 = sbr.rel (%p221) target = $region32
        $region31: #{mlpc_transformer_forward.1} parent=11 // pred_region
          _
        $region32: #{mlpc_transformer_forward.1} parent=11 // pred_fallthru
          _
        // Predicated region
        $region33: #{mlpc_transformer_forward.1} parent=11 // pred_check
          %p224 = pneg %p168
        $region34: #{mlpc_transformer_forward.1} parent=11 // pred_check_branch
          %226 = sbr.rel (%p224) target = $region36
        $region35: #{mlpc_transformer_forward.1} parent=11 // pred_region
          _
        $region36: #{mlpc_transformer_forward.1} parent=11 // pred_fallthru
          _
      $region12: #{mlpc_transformer_forward.1} parent=5 // pred_fallthru
        _
      %p227 = scmp.lt.s32.totalorder %s16, 2
      // Predicated region
      $region37: #{mlpc_transformer_forward.1} parent=5 // pred_check
        %p228 = pneg %p227
      $region38: #{mlpc_transformer_forward.1} parent=5 // pred_check_branch
        %230 = sbr.rel (%p228) target = $region40
      $region39: #{mlpc_transformer_forward.1} parent=5 // pred_region
        // Predicated region
        $region41: #{mlpc_transformer_forward.1} parent=39 // pred_check
          %p231 = pneg %p36
        $region42: #{mlpc_transformer_forward.1} parent=39 // pred_check_branch
          %233 = sbr.rel (%p231) target = $region44
        $region43: #{mlpc_transformer_forward.1} parent=39 // pred_region
          %s234 = sand.u32 %s26, 1
          %s235 = sand.u32 %s26, 1
          %s236 = smul.addr %s235, 16
          %s237 = scalar_lea.vmem [#allocation2], %s236
          %s238 = smul.addr %s16, 8
          %s239 = scalar_lea.vmem %s0, %s238
          // Predicated region
          $region45: #{mlpc_transformer_forward.1} parent=43 // pred_check
            _
          $region46: #{mlpc_transformer_forward.1} parent=43 // pred_check_branch
            %241 = sbr.rel (0) target = $region48
          $region47: #{mlpc_transformer_forward.1} parent=43 // pred_region
            // Predicated region
            $region49: #{mlpc_transformer_forward.1} parent=47 // pred_check
              _
            $region50: #{mlpc_transformer_forward.1} parent=47 // pred_check_branch
              %243 = sbr.rel (0) target = $region52
            $region51: #{mlpc_transformer_forward.1} parent=47 // pred_region
              // Predicated region
              $region64: #{mlpc_transformer_forward.1} parent=51 // pred_check
                _
              $region65: #{mlpc_transformer_forward.1} parent=51 // pred_check_branch
                %261 = sbr.rel (0) target = $region67
              $region66: #{mlpc_transformer_forward.1} parent=51 // pred_region
                loop: start=0, step=1, limit=1
                $region68: #{mlpc_transformer_forward.1} parent=66 // loop_pre_header
                  _
                $region69: #{mlpc_transformer_forward.1} parent=66 // loop_header
                  %s263 = sphi 0, %s267
                  %p264 = scmp.ge.s32.totalorder %s263, 1
                  %s268 = sphi %s239, %s239
                  %s269 = sphi %s237, %s237
                $region70: #{mlpc_transformer_forward.1} parent=66 // loop_header_branch
                  %266 = sbr.rel (%p264) target = $region74
                $region71: #{mlpc_transformer_forward.1} parent=66 // loop_body
                  %v270 = vld [vmem:[%s268] sm:$0xff]
                  %271 = vst [vmem:[%s269] sm:$0xff] %v270
                  %v272 = vld [vmem:[%s268 + $0x10] sm:$0xff]
                  %273 = vst [vmem:[%s269 + $0x8] sm:$0xff] %v272
                $region72: #{mlpc_transformer_forward.1} parent=66 // loop_footer
                  %s267 = sadd.s32 1, %s263
                $region73: #{mlpc_transformer_forward.1} parent=66 // loop_footer_branch
                  %262 = sbr.rel target = $region69
                $region74: #{mlpc_transformer_forward.1} parent=66 // loop_exit
                  _
              $region67: #{mlpc_transformer_forward.1} parent=51 // pred_fallthru
                _
              // Predicated region
              $region75: #{mlpc_transformer_forward.1} parent=51 // pred_check
                _
              $region76: #{mlpc_transformer_forward.1} parent=51 // pred_check_branch
                %275 = sbr.rel target = $region78
              $region77: #{mlpc_transformer_forward.1} parent=51 // pred_region
                _
              $region78: #{mlpc_transformer_forward.1} parent=51 // pred_fallthru
                _
            $region52: #{mlpc_transformer_forward.1} parent=47 // pred_fallthru
              _
            // Predicated region
            $region53: #{mlpc_transformer_forward.1} parent=47 // pred_check
              _
            $region54: #{mlpc_transformer_forward.1} parent=47 // pred_check_branch
              %245 = sbr.rel target = $region56
            $region55: #{mlpc_transformer_forward.1} parent=47 // pred_region
              %s247 = ssub.s32 256, 1
              loop: start=0, step=1, limit=1
              $region57: #{mlpc_transformer_forward.1} parent=55 // loop_pre_header
                _
              $region58: #{mlpc_transformer_forward.1} parent=55 // loop_header
                %s249 = sphi 0, %s253
                %p250 = scmp.ge.s32.totalorder %s249, 1
                %s254 = sphi %s239, %s239
                %s255 = sphi %s237, %s237
              $region59: #{mlpc_transformer_forward.1} parent=55 // loop_header_branch
                %252 = sbr.rel (%p250) target = $region63
              $region60: #{mlpc_transformer_forward.1} parent=55 // loop_body
                %v256 = vld [vmem:[%s254] sm:%s247]
                %257 = vst [vmem:[%s255] sm:%s247] %v256
                %v258 = vld [vmem:[%s254 + $0x10] sm:%s247]
                %259 = vst [vmem:[%s255 + $0x8] sm:%s247] %v258
              $region61: #{mlpc_transformer_forward.1} parent=55 // loop_footer
                %s253 = sadd.s32 1, %s249
              $region62: #{mlpc_transformer_forward.1} parent=55 // loop_footer_branch
                %248 = sbr.rel target = $region58
              $region63: #{mlpc_transformer_forward.1} parent=55 // loop_exit
                _
            $region56: #{mlpc_transformer_forward.1} parent=47 // pred_fallthru
              _
          $region48: #{mlpc_transformer_forward.1} parent=43 // pred_fallthru
            _
          %276 = vnop
        $region44: #{mlpc_transformer_forward.1} parent=39 // pred_fallthru
          _
      $region40: #{mlpc_transformer_forward.1} parent=5 // pred_fallthru
        _
      %p277 = scmp.le.s32.totalorder 1, %s16
      %p278 = scmp.lt.s32.totalorder %s16, 3
      %p279 = pnand %p277, %p278
      %p280 = pneg %p279
      // Predicated region
      $region79: #{mlpc_transformer_forward.1} parent=5 // pred_check
        _
      $region80: #{mlpc_transformer_forward.1} parent=5 // pred_check_branch
        %282 = sbr.rel (%p279) target = $region82
      $region81: #{mlpc_transformer_forward.1} parent=5 // pred_region
        %s283 = ssub.s32 %s16, 1
        %s284 = sand.u32 %s29, 1
        %s285 = sand.u32 %s29, 1
        %s286 = smul.addr %s285, 16
        %s287 = scalar_lea.vmem [#allocation2], %s286
        // Predicated region
        $region83: #{mlpc_transformer_forward.1} parent=81 // pred_check
          %p288 = pneg %p42
        $region84: #{mlpc_transformer_forward.1} parent=81 // pred_check_branch
          %290 = sbr.rel (%p288) target = $region86
        $region85: #{mlpc_transformer_forward.1} parent=81 // pred_region
          _
        $region86: #{mlpc_transformer_forward.1} parent=81 // pred_fallthru
          _
        %s291 = sand.u32 %s29, 1
        %s292 = sand.u32 %s29, 1
        %s293 = smul.addr %s292, 16
        %s294 = scalar_lea.vmem [#allocation2], %s293
        %p295 = pneg %p42
        %p296 = pneg %p39
        %p297 = pneg %p63
        %p298 = pneg %p60
        %p299 = pneg %p84
        %p300 = pneg %p81
        %p301 = pneg %p105
        %p302 = pneg %p102
        %p303 = pneg %p126
        %p304 = pneg %p123
        %p305 = pneg %p147
        %p306 = pneg %p144
        %p307 = pneg %p168
        %p308 = pneg %p165
        %p309 = pneg %p194
        %p310 = pneg %p191
        %s311 = sand.u32 %s181, 1
        %s312 = scalar_lea.sflag [#allocation4], %s311
        %s313 = sand.u32 %s181, 1
        %s314 = smul.addr %s313, 24
        %s315 = scalar_lea.vmem [#allocation3], %s314
        %v316 = vld [vmem:[%s287] sm:$0xff]
        %v317 = vld [vmem:[%s287 + $0x8] sm:$0x3f]
        %v318 = vld [vmem:[%s1] sm:$0xff]
        %v319 = vld [vmem:[%s1 + $0x8] sm:$0xff]
        %v320 = vld [vmem:[%s1 + $0x10] sm:$0xff]
        %v321 = vld [vmem:[%s1 + $0x18] sm:$0xff]
        %v322 = vld [vmem:[%s1 + $0x20] sm:$0xff]
        %v323 = vld [vmem:[%s1 + $0x28] sm:$0xff]
        %v324 = vld [vmem:[%s1 + $0x30] sm:$0xff]
        %v325 = vld [vmem:[%s1 + $0x38] sm:$0xff]
        %v326 = vld [vmem:[%s2] sm:$0xff]
        %v327 = vld [vmem:[%s2 + $0x8] sm:$0xff]
        %v328 = vld [vmem:[%s2 + $0x10] sm:$0xff]
        %v329 = vld [vmem:[%s2 + $0x18] sm:$0xff]
        %v330 = vld [vmem:[%s2 + $0x20] sm:$0xff]
        %v331 = vld [vmem:[%s2 + $0x28] sm:$0xff]
        %v332 = vld [vmem:[%s2 + $0x30] sm:$0xff]
        %v333 = vld [vmem:[%s2 + $0x38] sm:$0xff]
        %335 = vset.pattern.permute.xlu0 0
        %336 = vperm.xlu0 %335, %v326
        %v337 = vpop.permute.xlu0 %336
        %340 = vset.pattern.permute.xlu0 0
        %341 = vperm.xlu0 %340, %v327
        %v342 = vpop.permute.xlu0 %341
        %345 = vset.pattern.permute.xlu0 0
        %346 = vperm.xlu0 %345, %v328
        %v347 = vpop.permute.xlu0 %346
        %350 = vset.pattern.permute.xlu0 0
        %351 = vperm.xlu0 %350, %v329
        %v352 = vpop.permute.xlu0 %351
        %355 = vset.pattern.permute.xlu0 0
        %356 = vperm.xlu0 %355, %v330
        %v357 = vpop.permute.xlu0 %356
        %360 = vset.pattern.permute.xlu0 0
        %361 = vperm.xlu0 %360, %v331
        %v362 = vpop.permute.xlu0 %361
        %365 = vset.pattern.permute.xlu0 0
        %366 = vperm.xlu0 %365, %v332
        %v367 = vpop.permute.xlu0 %366
        %370 = vset.pattern.permute.xlu0 0
        %371 = vperm.xlu0 %370, %v333
        %v372 = vpop.permute.xlu0 %371
        %vm374 = vcmask 113664
        %v376 = vsel %vm374, %v318, 0
        %v379 = vsel %vm374, %v319, 0
        %v382 = vsel %vm374, %v320, 0
        %v385 = vsel %vm374, %v321, 0
        %v388 = vsel %vm374, %v322, 0
        %v391 = vsel %vm374, %v323, 0
        %v394 = vsel %vm374, %v324, 0
        %v397 = vsel %vm374, %v325, 0
        %vm399 = vcmask 1045504
        %v401 = vsel %vm399, %v317, 0
        %403 = vmatpush.msra.mxu0 0.0
        %404 = vmatpush.msra.mxu0 0.0
        %405 = vmatpush.msra.mxu0 0.0
        %406 = vmatpush.msra.mxu0 0.0
        %407 = vmatpush.msra.mxu0 0.0
        %408 = vmatpush.msra.mxu0 0.0
        %409 = vmatpush.msra.mxu0 0.0
        %410 = vmatpush.msra.mxu0 0.0
        %411 = vmatpush.msra.mxu0 0.0
        %412 = vmatpush.msra.mxu0 0.0
        %413 = vmatpush.msra.mxu0 0.0
        %414 = vmatpush.msra.mxu0 0.0
        %415 = vmatpush.msra.mxu0 0.0
        %416 = vmatpush.msra.mxu0 0.0
        %417 = vmatpush.msra.mxu0 %v401
        %418 = vmatpush.msra.mxu0 %v316
        %419 = vmatmul.f32.gmra.mxu0 %v376
        %v420 = vpop.f32.mrf.mxu0
        %v421 = vadd.f32 %v337, %v420
        %422 = vmatmul.f32.gmra.mxu0 %v379
        %v423 = vpop.f32.mrf.mxu0
        %v424 = vadd.f32 %v342, %v423
        %425 = vmatmul.f32.gmra.mxu0 %v382
        %v426 = vpop.f32.mrf.mxu0
        %v427 = vadd.f32 %v347, %v426
        %428 = vmatmul.f32.gmra.mxu0 %v385
        %v429 = vpop.f32.mrf.mxu0
        %v430 = vadd.f32 %v352, %v429
        %431 = vmatmul.f32.gmra.mxu0 %v388
        %v432 = vpop.f32.mrf.mxu0
        %v433 = vadd.f32 %v357, %v432
        %434 = vmatmul.f32.gmra.mxu0 %v391
        %v435 = vpop.f32.mrf.mxu0
        %v436 = vadd.f32 %v362, %v435
        %437 = vmatmul.f32.gmra.mxu0 %v394
        %v438 = vpop.f32.mrf.mxu0
        %v439 = vadd.f32 %v367, %v438
        %440 = vmatmul.f32.gmra.mxu0 %v397
        %v441 = vpop.f32.mrf.mxu0
        %v442 = vadd.f32 %v372, %v441
        %443 = vdwg.mxu0
        %v444 = vmax.f32 %v421, 0.0
        %v445 = vmax.f32 %v424, 0.0
        %v446 = vmax.f32 %v427, 0.0
        %v447 = vmax.f32 %v430, 0.0
        %v448 = vmax.f32 %v433, 0.0
        %v449 = vmax.f32 %v436, 0.0
        %v450 = vmax.f32 %v439, 0.0
        %v451 = vmax.f32 %v442, 0.0
        %v452 = vld [vmem:[%s3] sm:$0xff]
        %v453 = vld [vmem:[%s3 + $0x8] sm:$0xff]
        %v454 = vld [vmem:[%s3 + $0x10] sm:$0xff]
        %v455 = vld [vmem:[%s3 + $0x18] sm:$0xff]
        %v456 = vld [vmem:[%s3 + $0x20] sm:$0xff]
        %v457 = vld [vmem:[%s3 + $0x28] sm:$0xff]
        %v458 = vld [vmem:[%s3 + $0x30] sm:$0xff]
        %v459 = vld [vmem:[%s3 + $0x38] sm:$0xff]
        %v460 = vld [vmem:[%s4] sm:$0xff]
        %v461 = vld [vmem:[%s4 + $0x8] sm:$0xff]
        %v462 = vld [vmem:[%s4 + $0x10] sm:$0xff]
        %v463 = vld [vmem:[%s4 + $0x18] sm:$0xff]
        %v464 = vld [vmem:[%s4 + $0x20] sm:$0xff]
        %v465 = vld [vmem:[%s4 + $0x28] sm:$0xff]
        %v466 = vld [vmem:[%s4 + $0x30] sm:$0xff]
        %v467 = vld [vmem:[%s4 + $0x38] sm:$0xff]
        %469 = vset.pattern.permute.xlu0 0
        %470 = vperm.xlu0 %469, %v460
        %v471 = vpop.permute.xlu0 %470
        %474 = vset.pattern.permute.xlu0 0
        %475 = vperm.xlu0 %474, %v461
        %v476 = vpop.permute.xlu0 %475
        %479 = vset.pattern.permute.xlu0 0
        %480 = vperm.xlu0 %479, %v462
        %v481 = vpop.permute.xlu0 %480
        %484 = vset.pattern.permute.xlu0 0
        %485 = vperm.xlu0 %484, %v463
        %v486 = vpop.permute.xlu0 %485
        %489 = vset.pattern.permute.xlu0 0
        %490 = vperm.xlu0 %489, %v464
        %v491 = vpop.permute.xlu0 %490
        %494 = vset.pattern.permute.xlu0 0
        %495 = vperm.xlu0 %494, %v465
        %v496 = vpop.permute.xlu0 %495
        %499 = vset.pattern.permute.xlu0 0
        %500 = vperm.xlu0 %499, %v466
        %v501 = vpop.permute.xlu0 %500
        %504 = vset.pattern.permute.xlu0 0
        %505 = vperm.xlu0 %504, %v467
        %v506 = vpop.permute.xlu0 %505
        %vm508 = vcmask 523264
        %v510 = vsel %vm508, %v452, 0
        %v513 = vsel %vm508, %v453, 0
        %v516 = vsel %vm508, %v454, 0
        %v519 = vsel %vm508, %v455, 0
        %v522 = vsel %vm508, %v456, 0
        %v525 = vsel %vm508, %v457, 0
        %v528 = vsel %vm508, %v458, 0
        %v531 = vsel %vm508, %v459, 0
        %533 = vmatpush.msra.mxu0 0.0
        %534 = vmatpush.msra.mxu0 0.0
        %535 = vmatpush.msra.mxu0 0.0
        %536 = vmatpush.msra.mxu0 0.0
        %537 = vmatpush.msra.mxu0 0.0
        %538 = vmatpush.msra.mxu0 0.0
        %539 = vmatpush.msra.mxu0 0.0
        %540 = vmatpush.msra.mxu0 0.0
        %541 = vmatpush.msra.mxu0 %v451
        %542 = vmatpush.msra.mxu0 %v450
        %543 = vmatpush.msra.mxu0 %v449
        %544 = vmatpush.msra.mxu0 %v448
        %545 = vmatpush.msra.mxu0 %v447
        %546 = vmatpush.msra.mxu0 %v446
        %547 = vmatpush.msra.mxu0 %v445
        %548 = vmatpush.msra.mxu0 %v444
        %549 = vmatmul.f32.gmra.mxu0 %v510
        %v550 = vpop.f32.mrf.mxu0
        %v551 = vadd.f32 %v471, %v550
        %552 = vmatmul.f32.gmra.mxu0 %v513
        %v553 = vpop.f32.mrf.mxu0
        %v554 = vadd.f32 %v476, %v553
        %555 = vmatmul.f32.gmra.mxu0 %v516
        %v556 = vpop.f32.mrf.mxu0
        %v557 = vadd.f32 %v481, %v556
        %558 = vmatmul.f32.gmra.mxu0 %v519
        %v559 = vpop.f32.mrf.mxu0
        %v560 = vadd.f32 %v486, %v559
        %561 = vmatmul.f32.gmra.mxu0 %v522
        %v562 = vpop.f32.mrf.mxu0
        %v563 = vadd.f32 %v491, %v562
        %564 = vmatmul.f32.gmra.mxu0 %v525
        %v565 = vpop.f32.mrf.mxu0
        %v566 = vadd.f32 %v496, %v565
        %567 = vmatmul.f32.gmra.mxu0 %v528
        %v568 = vpop.f32.mrf.mxu0
        %v569 = vadd.f32 %v501, %v568
        %570 = vmatmul.f32.gmra.mxu0 %v531
        %v571 = vpop.f32.mrf.mxu0
        %v572 = vadd.f32 %v506, %v571
        %573 = vdwg.mxu0
        %v574 = vmax.f32 %v551, 0.0
        %v575 = vmax.f32 %v554, 0.0
        %v576 = vmax.f32 %v557, 0.0
        %v577 = vmax.f32 %v560, 0.0
        %v578 = vmax.f32 %v563, 0.0
        %v579 = vmax.f32 %v566, 0.0
        %v580 = vmax.f32 %v569, 0.0
        %v581 = vmax.f32 %v572, 0.0
        %v582 = vld [vmem:[%s5] sm:$0xff]
        %v583 = vld [vmem:[%s6] sm:$0xff]
        %585 = vset.pattern.permute.xlu0 0
        %586 = vperm.xlu0 %585, %v583
        %v587 = vpop.permute.xlu0 %586
        %v590 = vsel %vm508, %v582, 0
        %592 = vmatpush.msra.mxu0 0.0
        %593 = vmatpush.msra.mxu0 0.0
        %594 = vmatpush.msra.mxu0 0.0
        %595 = vmatpush.msra.mxu0 0.0
        %596 = vmatpush.msra.mxu0 0.0
        %597 = vmatpush.msra.mxu0 0.0
        %598 = vmatpush.msra.mxu0 0.0
        %599 = vmatpush.msra.mxu0 0.0
        %600 = vmatpush.msra.mxu0 %v581
        %601 = vmatpush.msra.mxu0 %v580
        %602 = vmatpush.msra.mxu0 %v579
        %603 = vmatpush.msra.mxu0 %v578
        %604 = vmatpush.msra.mxu0 %v577
        %605 = vmatpush.msra.mxu0 %v576
        %606 = vmatpush.msra.mxu0 %v575
        %607 = vmatpush.msra.mxu0 %v574
        %608 = vmatmul.f32.gmra.mxu0 %v590
        %v609 = vpop.f32.mrf.mxu0
        %v610 = vadd.f32 %v587, %v609
        %611 = vdwg.mxu0
        %612 = vst [vmem:[%s315] sm:$0xff] %v610
        %613 = vst [vmem:[%s315 + $0x8] sm:$0xff] %v316
        %614 = vst [vmem:[%s315 + $0x10] sm:$0x3f] %v317
        %s615 = sand.u32 %s181, 1
        %s616 = scalar_lea.sflag [#allocation4], %s615
        %s617 = sand.u32 %s181, 1
        %s618 = smul.addr %s617, 24
        %s619 = scalar_lea.vmem [#allocation3], %s618
        // Predicated region
        $region87: #{mlpc_transformer_forward.1} parent=81 // pred_check
          %p620 = pneg %p191
        $region88: #{mlpc_transformer_forward.1} parent=81 // pred_check_branch
          %622 = sbr.rel (%p620) target = $region90
        $region89: #{mlpc_transformer_forward.1} parent=81 // pred_region
          %624 = vsyncadd %s616, 0
          %s625 = smul.addr %s21, 8
          %s626 = scalar_lea.hbm %s7, %s625
          %s627 = sshll.u32 %s619, 4
          %s628 = int_to_ptr.vmem [resolvable:$true] %s627
          %s629 = sshll.u32 %s626, 4
          %s630 = int_to_ptr.hbm [resolvable:$true] %s629
          %635 = dma.vmem_to_hbm [thread:$0]  %s628, 384, %s630, %s616, 128, 256, 8
        $region90: #{mlpc_transformer_forward.1} parent=81 // pred_fallthru
          _
      $region82: #{mlpc_transformer_forward.1} parent=5 // pred_fallthru
        _
      %p636 = scmp.le.s32.totalorder 2, %s16
      // Predicated region
      $region91: #{mlpc_transformer_forward.1} parent=5 // pred_check
        %p637 = pneg %p636
      $region92: #{mlpc_transformer_forward.1} parent=5 // pred_check_branch
        %639 = sbr.rel (%p637) target = $region94
      $region93: #{mlpc_transformer_forward.1} parent=5 // pred_region
        %s640 = ssub.s32 %s16, 2
        // Predicated region
        $region95: #{mlpc_transformer_forward.1} parent=93 // pred_check
          %p641 = pneg %p197
        $region96: #{mlpc_transformer_forward.1} parent=93 // pred_check_branch
          %643 = sbr.rel (%p641) target = $region98
        $region97: #{mlpc_transformer_forward.1} parent=93 // pred_region
          %s644 = sand.u32 %s182, 1
          %s645 = scalar_lea.sflag [#allocation4], %s644
          %s646 = sand.u32 %s182, 1
          %s647 = smul.addr %s646, 24
          %s648 = scalar_lea.vmem [#allocation3], %s647
          %650 = dma.done %s645, 384
        $region98: #{mlpc_transformer_forward.1} parent=93 // pred_fallthru
          _
      $region94: #{mlpc_transformer_forward.1} parent=5 // pred_fallthru
        _
    $region6: #{mlpc_transformer_forward.1} parent=1 // loop_footer
      %s20 = sadd.s32 1, %s16
    $region7: #{mlpc_transformer_forward.1} parent=1 // loop_footer_branch
      %15 = sbr.rel target = $region3
    $region8: #{mlpc_transformer_forward.1} parent=1 // loop_exit
      _
    %651 = vsyncpa [#allocation4], 1
    %s652 = scalar_lea.sflag [#allocation4], 1
    %653 = vsyncpa %s652, 1

</llo_original>
